<compile_context>
chip_gen: v7x
topology: tpu7x:2x2x1
jax: 0.10.0
libtpu: 0.0.40
codegen_flags: <defaults>
</compile_context>

<pallas_src>
import functools

import jax
import jax.numpy as jnp
from jax.experimental import pallas as pl
from jax.experimental.pallas import tpu as pltpu

BN_EPS = 1e-5


def _class_head_kernel(x_ref, w_ref, b_ref, o_ref, acc_ref, oacc_ref, *, hw, thw):
    """One grid step of the fused pool -> BN -> Linear head.

    x_ref   : (TB, TC, THW) activation tile, NCHW-flattened (HW on lanes), native dtype
    w_ref   : (TC, O_pad)   BN+1/HW-folded weight slab for this channel tile
    b_ref   : (1, O_pad)    folded constant bias (f32)
    o_ref   : (TB, O_pad)   output tile (f32)
    acc_ref : (TB, TC)  f32 spatial-sum accumulator (persists across the spatial axis)
    oacc_ref: (TB, O_pad) f32 output accumulator (persists across channel+spatial axes)
    """
    c = pl.program_id(1)
    j = pl.program_id(2)
    nc = pl.num_programs(1)
    nj = pl.num_programs(2)

    @pl.when(jnp.logical_and(c == 0, j == 0))
    def _init_out_acc():
        oacc_ref[...] = jnp.zeros_like(oacc_ref)

    @pl.when(j == 0)
    def _init_acc():
        acc_ref[...] = jnp.zeros_like(acc_ref)

    def _accumulate(x):
        # Lane-axis (HW) reduction, f32 accumulation.
        acc_ref[...] += jnp.sum(x, axis=2, dtype=jnp.float32)

    if hw % thw != 0:
        # Ragged final spatial tile: mask the OOB lane tail, only on the last step.
        @pl.when(j != nj - 1)
        def _plain():
            _accumulate(x_ref[...])

        @pl.when(j == nj - 1)
        def _masked():
            x = x_ref[...]
            valid = hw - j * thw
            lane = jax.lax.broadcasted_iota(jnp.int32, x.shape, 2)
            _accumulate(jnp.where(lane < valid, x, jnp.zeros_like(x)))
    else:
        _accumulate(x_ref[...])

    @pl.when(j == nj - 1)
    def _partial_matmul():
        # pooled spatial *sum* (TB, TC) @ folded weight (TC, O_pad);
        # BN scale/shift and the 1/HW mean factor live inside w_ref / b_ref.
        oacc_ref[...] += jnp.dot(acc_ref[...], w_ref[...].astype(jnp.float32),
                                 preferred_element_type=jnp.float32)

    @pl.when(jnp.logical_and(c == nc - 1, j == nj - 1))
    def _finalize():
        o_ref[...] = (oacc_ref[...] + b_ref[...]).astype(o_ref.dtype)


def _round_up(x, m):
    return ((x + m - 1) // m) * m


def fold_class_head_params(gamma, beta, running_mean, running_var, weight, *, hw,
                           act_dtype=jnp.float32):
    """Fold eval-mode BN + the 1/HW mean scale into the Linear weight (do this once).

    Returns (w_fold, b_fold) with the output dim padded to a multiple of 128 so the
    kernel's matmul / output stores are lane-dense:
      w_fold[c, o] = W.T[c, o] * gamma[c] * rsqrt(var[c]+eps) / HW       (act dtype)
      b_fold[o]    = ((beta - mean * gamma * rsqrt(var+eps)) @ W.T)[o]   (f32)
    """
    out_features = weight.shape[0]
    f32 = jnp.float32
    scale = gamma.astype(f32) * jax.lax.rsqrt(running_var.astype(f32) + BN_EPS)  # (C,)
    w_t = weight.astype(f32).T                                                   # (C, O)
    w_fold = w_t * (scale / float(hw))[:, None]                                  # (C, O)
    b_fold = (beta.astype(f32) - running_mean.astype(f32) * scale) @ w_t         # (O,)
    o_pad = _round_up(out_features, 128)
    if o_pad != out_features:
        w_fold = jnp.pad(w_fold, ((0, 0), (0, o_pad - out_features)))
        b_fold = jnp.pad(b_fold, (0, o_pad - out_features))
    return w_fold.astype(act_dtype), b_fold.reshape(1, o_pad).astype(f32)


def _sublane_multiple(dtype):
    # Native sublane packing: 8 for 4-byte, 16 for 2-byte, 32 for 1-byte dtypes.
    return max(8, 32 // jnp.dtype(dtype).itemsize)


def _pick_batch_tile(b):
    if b <= 8:
        return b                       # block == full dim is always legal
    return min(128, (b // 8) * 8)      # 8-aligned output rows; ragged batch tail benign


def _pick_channel_tile(c, tb, thw_est, itemsize, target_bytes, sub):
    """Full C if it fits the tile budget, else the largest divisor of C that is a
    multiple of the sublane packing (only exact divisors: ragged channel tiles would
    feed garbage channels into the matmul)."""
    if c <= sub or tb * c * thw_est * itemsize <= target_bytes:
        return c
    cap = max(sub, target_bytes // (tb * thw_est * itemsize))
    tc = min((cap // sub) * sub, (c // sub) * sub)
    while tc >= sub and c % tc != 0:
        tc -= sub
    return int(tc) if tc >= sub else c


def _pick_spatial_tile(hw, tb, tc, itemsize, target_bytes):
    """Full HW if it fits, else the largest multiple of 128 under the budget
    (the ragged tail is masked in-kernel on the last spatial step only)."""
    if hw <= 128 or tb * tc * hw * itemsize <= target_bytes:
        return hw
    max_aligned = (hw // 128) * 128
    thw = 128
    while thw + 128 <= max_aligned and tb * tc * (thw + 128) * itemsize <= target_bytes:
        thw += 128
    return thw


def class_head_forward(x, gamma, beta, running_mean, running_var, weight, *,
                       batch_tile=None, channel_tile=None, spatial_tile=None,
                       folded=None, tile_budget_bytes=4 << 20):
    """x: (B, C, H, W) NCHW; weight: (out_features, in_features) as in PyTorch.

    `folded`: optional precomputed (w_fold, b_fold) from fold_class_head_params, so the
    BN/1-over-HW fold is hoisted out of the traced forward when parameters are static.
    """
    B, C, H, W = x.shape
    out_features = weight.shape[0]
    HW = H * W

    # Free reshape: stay in NCHW (no HBM transpose pass). HW lands on lanes, C on
    # sublanes, so pooling becomes a lane-axis reduction inside the kernel.
    x3 = x.reshape(B, C, HW)

    if folded is None:
        folded = fold_class_head_params(gamma, beta, running_mean, running_var, weight,
                                        hw=HW, act_dtype=x.dtype)
    w_fold, b_fold = folded
    o_pad = w_fold.shape[1]

    itemsize = jnp.dtype(x.dtype).itemsize
    sub = _sublane_multiple(x.dtype)

    TB = batch_tile if batch_tile is not None else _pick_batch_tile(B)
    thw_est = HW if HW <= 128 else 128
    TC = (channel_tile if channel_tile is not None
          else _pick_channel_tile(C, TB, thw_est, itemsize, tile_budget_bytes, sub))
    THW = (spatial_tile if spatial_tile is not None
           else _pick_spatial_tile(HW, TB, TC, itemsize, tile_budget_bytes))

    assert TB == B or TB % 8 == 0, "batch tile must be 8-aligned or the full batch"
    assert TC == C or (TC % sub == 0 and C % TC == 0), "channel tile must divide C"
    assert THW == HW or THW % 128 == 0, "spatial tile must be lane-aligned (128)"

    grid = (pl.cdiv(B, TB), pl.cdiv(C, TC), pl.cdiv(HW, THW))
    kernel = functools.partial(_class_head_kernel, hw=HW, thw=THW)

    # Scoped-VMEM budget: double-buffered x tile + weight slab + scratch + output.
    # (64 MiB cap is safe on all of v5e/v6e/v7x; 32 MiB floor clears the defaults.)
    w_itemsize = jnp.dtype(w_fold.dtype).itemsize
    vmem_est = (2 * TB * TC * THW * itemsize        # pipelined x tiles
                + 2 * TC * o_pad * w_itemsize       # pipelined weight slabs
                + TB * TC * 4 + TB * o_pad * 4      # acc + output accumulator
                + 2 * TB * o_pad * 4                # output tile buffers
                + 2 * o_pad * 4                     # bias
                + (2 << 20))                        # headroom
    vmem_limit = int(min(64 << 20, max(32 << 20, vmem_est)))

    out = pl.pallas_call(
        kernel,
        out_shape=jax.ShapeDtypeStruct((B, o_pad), jnp.float32),
        grid=grid,
        in_specs=[
            pl.BlockSpec((TB, TC, THW), lambda i, c, j: (i, c, j)),
            pl.BlockSpec((TC, o_pad), lambda i, c, j: (c, 0)),
            pl.BlockSpec((1, o_pad), lambda i, c, j: (0, 0)),
        ],
        out_specs=pl.BlockSpec((TB, o_pad), lambda i, c, j: (i, 0)),
        scratch_shapes=[
            pltpu.VMEM((TB, TC), jnp.float32),      # spatial-sum accumulator
            pltpu.VMEM((TB, o_pad), jnp.float32),   # output accumulator across C tiles
        ],
        compiler_params=pltpu.CompilerParams(
            dimension_semantics=("parallel", "arbitrary", "arbitrary"),
            vmem_limit_bytes=vmem_limit,
        ),
    )(x3, w_fold, b_fold)

    return out[:, :out_features] if o_pad != out_features else out


def _reference(x, gamma, beta, running_mean, running_var, weight):
    pooled = jnp.mean(x.astype(jnp.float32), axis=(2, 3))                 # (B, C)
    y = (pooled - running_mean) / jnp.sqrt(running_var + BN_EPS) * gamma + beta
    return y @ weight.T


if __name__ == "__main__":
    key = jax.random.PRNGKey(0)

    def make_params(k, C, O):
        k_g, k_b, k_m, k_v, k_w = jax.random.split(k, 5)
        gamma = 1.0 + 0.1 * jax.random.normal(k_g, (C,), jnp.float32)
        beta = 0.1 * jax.random.normal(k_b, (C,), jnp.float32)
        mean = 0.1 * jax.random.normal(k_m, (C,), jnp.float32)
        var = 1.0 + 0.1 * jax.random.uniform(k_v, (C,), jnp.float32)
        w = jax.random.normal(k_w, (O, C), jnp.float32) * (C ** -0.5)
        return gamma, beta, mean, var, w

    k1, k2, k3, kx1, kx2, kx3 = jax.random.split(key, 6)

    # 1) Small module-consistent shapes, auto tile selection (single-step path).
    B, C, H, W, O = 2, 4, 16, 16, 8
    x = jax.random.normal(kx1, (B, C, H, W), jnp.float32)
    params = make_params(k1, C, O)
    ref = _reference(x, *params)
    out = jax.block_until_ready(class_head_forward(x, *params))
    assert out.shape == (B, O)
    assert jnp.allclose(out, ref, atol=1e-4, rtol=1e-4), "auto-tile mismatch vs reference"

    # 2) Ragged spatial extent (HW=225, THW=128): multi-step accumulation plus the
    #    pl.when-gated last-step mask.
    B, C, H, W, O = 2, 4, 15, 15, 8
    x = jax.random.normal(kx2, (B, C, H, W), jnp.float32)
    params = make_params(k2, C, O)
    ref = _reference(x, *params)
    out = jax.block_until_ready(class_head_forward(x, *params, spatial_tile=128))
    assert jnp.allclose(out, ref, atol=1e-4, rtol=1e-4), "ragged-spatial mismatch vs reference"

    # 3) Channel tiling (C=16, TC=8), ragged batch (B=10, TB=8, benign: OOB output
    #    rows are clipped and rows never mix), multi-step spatial, pre-folded params.
    B, C, H, W, O = 10, 16, 16, 16, 8
    x = jax.random.normal(kx3, (B, C, H, W), jnp.float32)
    params = make_params(k3, C, O)
    ref = _reference(x, *params)
    folded = fold_class_head_params(*params, hw=H * W, act_dtype=x.dtype)
    out = jax.block_until_ready(
        class_head_forward(x, *params, folded=folded,
                           batch_tile=8, channel_tile=8, spatial_tile=128))
    assert out.shape == (B, O)
    assert jnp.allclose(out, ref, atol=1e-4, rtol=1e-4), "channel-tiled mismatch vs reference"

    print("KERNEL_OK")
</pallas_src>

<mosaic_0001>
module attributes {stable_mosaic.version = 11 : i64} {
  func.func @_class_head_kernel(%arg0: i32, %arg1: i32, %arg2: i32, %arg3: memref<2x4x256xf32, #tpu.memory_space<vmem>>, %arg4: memref<4x128xf32, #tpu.memory_space<vmem>>, %arg5: memref<1x128xf32, #tpu.memory_space<vmem>>, %arg6: memref<2x128xf32, #tpu.memory_space<vmem>>, %arg7: memref<2x4xf32, #tpu.memory_space<vmem>>, %arg8: memref<2x128xf32, #tpu.memory_space<vmem>>) attributes {dimension_semantics = [#tpu.dimension_semantics<parallel>, #tpu.dimension_semantics<arbitrary>, #tpu.dimension_semantics<arbitrary>], iteration_bounds = array<i64: 1, 1, 1>, scalar_prefetch = 0 : i64, scratch_operands = 2 : i64, tpu.core_type = #tpu.core_type<tc>, window_params = [{transform_indices = @transform_0, window_bounds = array<i64: 2, 4, 256>}, {transform_indices = @transform_1, window_bounds = array<i64: 4, 128>}, {pipeline_mode = #tpu.pipeline_mode<synchronous>, transform_indices = @transform_2, window_bounds = array<i64: 1, 128>}, {transform_indices = @transform_3, window_bounds = array<i64: 2, 128>}]} {
    %c0_i32 = arith.constant 0 : i32
    %0 = arith.cmpi eq, %arg1, %c0_i32 : i32
    %c0_i32_0 = arith.constant 0 : i32
    %1 = arith.cmpi eq, %arg2, %c0_i32_0 : i32
    %2 = arith.andi %0, %1 : i1
    %3 = arith.extui %2 : i1 to i32
    %c0_i32_1 = arith.constant 0 : i32
    %4 = arith.cmpi ne, %3, %c0_i32_1 : i32
    scf.if %4 {
      %cst_15 = arith.constant 0.000000e+00 : f32
      %21 = vector.broadcast %cst_15 : f32 to vector<2x128xf32>
      %c0_16 = arith.constant 0 : index
      %c0_17 = arith.constant 0 : index
      %22 = vector.load %arg8[%c0_16, %c0_17] : memref<2x128xf32, #tpu.memory_space<vmem>>, vector<2x128xf32>
      tpu.vector_store %arg8[%c0_16, %c0_17], %21 {strides = array<i32>} : memref<2x128xf32, #tpu.memory_space<vmem>>, vector<2x128xf32>,
    } else {
    }
    %c0_i32_2 = arith.constant 0 : i32
    %5 = arith.cmpi eq, %arg2, %c0_i32_2 : i32
    %6 = arith.extui %5 : i1 to i32
    %c0_i32_3 = arith.constant 0 : i32
    %7 = arith.cmpi ne, %6, %c0_i32_3 : i32
    scf.if %7 {
      %cst_15 = arith.constant 0.000000e+00 : f32
      %21 = vector.broadcast %cst_15 : f32 to vector<2x4xf32>
      %c0_16 = arith.constant 0 : index
      %c0_17 = arith.constant 0 : index
      %22 = vector.load %arg7[%c0_16, %c0_17] : memref<2x4xf32, #tpu.memory_space<vmem>>, vector<2x4xf32>
      tpu.vector_store %arg7[%c0_16, %c0_17], %21 {strides = array<i32>} : memref<2x4xf32, #tpu.memory_space<vmem>>, vector<2x4xf32>,
    } else {
    }
    %c0 = arith.constant 0 : index
    %c0_4 = arith.constant 0 : index
    %c0_5 = arith.constant 0 : index
    %8 = vector.load %arg3[%c0, %c0_4, %c0_5] : memref<2x4x256xf32, #tpu.memory_space<vmem>>, vector<2x4x256xf32>
    %c0_6 = arith.constant 0 : index
    %c0_7 = arith.constant 0 : index
    %9 = vector.load %arg7[%c0_6, %c0_7] : memref<2x4xf32, #tpu.memory_space<vmem>>, vector<2x4xf32>
    %cst = arith.constant dense<0.000000e+00> : vector<2x4xf32>
    %10 = vector.multi_reduction <add>, %8, %cst [2] : vector<2x4x256xf32> to vector<2x4xf32>
    %11 = arith.addf %9, %10 : vector<2x4xf32>
    %c0_8 = arith.constant 0 : index
    %c0_9 = arith.constant 0 : index
    %12 = vector.load %arg7[%c0_8, %c0_9] : memref<2x4xf32, #tpu.memory_space<vmem>>, vector<2x4xf32>
    tpu.vector_store %arg7[%c0_8, %c0_9], %11 {strides = array<i32>} : memref<2x4xf32, #tpu.memory_space<vmem>>, vector<2x4xf32>,
    %c0_i32_10 = arith.constant 0 : i32
    %13 = arith.cmpi eq, %arg2, %c0_i32_10 : i32
    %14 = arith.extui %13 : i1 to i32
    %c0_i32_11 = arith.constant 0 : i32
    %15 = arith.cmpi ne, %14, %c0_i32_11 : i32
    scf.if %15 {
      %c0_15 = arith.constant 0 : index
      %c0_16 = arith.constant 0 : index
      %21 = vector.load %arg8[%c0_15, %c0_16] : memref<2x128xf32, #tpu.memory_space<vmem>>, vector<2x128xf32>
      %c0_17 = arith.constant 0 : index
      %c0_18 = arith.constant 0 : index
      %22 = vector.load %arg7[%c0_17, %c0_18] : memref<2x4xf32, #tpu.memory_space<vmem>>, vector<2x4xf32>
      %c0_19 = arith.constant 0 : index
      %c0_20 = arith.constant 0 : index
      %23 = vector.load %arg4[%c0_19, %c0_20] : memref<4x128xf32, #tpu.memory_space<vmem>>, vector<4x128xf32>
      %cst_21 = arith.constant dense<0.000000e+00> : vector<2x128xf32>
      %24 = tpu.matmul %22, %23, %cst_21 {dimension_numbers = #tpu.dot_dimension_numbers<[1], [0], [0], [1], [0, 0, 1, 1], [], []>} : vector<2x4xf32>, vector<4x128xf32>, vector<2x128xf32> -> vector<2x128xf32>
      %25 = arith.addf %21, %24 : vector<2x128xf32>
      %c0_22 = arith.constant 0 : index
      %c0_23 = arith.constant 0 : index
      %26 = vector.load %arg8[%c0_22, %c0_23] : memref<2x128xf32, #tpu.memory_space<vmem>>, vector<2x128xf32>
      tpu.vector_store %arg8[%c0_22, %c0_23], %25 {strides = array<i32>} : memref<2x128xf32, #tpu.memory_space<vmem>>, vector<2x128xf32>,
    } else {
    }
    %c0_i32_12 = arith.constant 0 : i32
    %16 = arith.cmpi eq, %arg1, %c0_i32_12 : i32
    %c0_i32_13 = arith.constant 0 : i32
    %17 = arith.cmpi eq, %arg2, %c0_i32_13 : i32
    %18 = arith.andi %16, %17 : i1
    %19 = arith.extui %18 : i1 to i32
    %c0_i32_14 = arith.constant 0 : i32
    %20 = arith.cmpi ne, %19, %c0_i32_14 : i32
    scf.if %20 {
      %c0_15 = arith.constant 0 : index
      %c0_16 = arith.constant 0 : index
      %21 = vector.load %arg8[%c0_15, %c0_16] : memref<2x128xf32, #tpu.memory_space<vmem>>, vector<2x128xf32>
      %c0_17 = arith.constant 0 : index
      %c0_18 = arith.constant 0 : index
      %22 = vector.load %arg5[%c0_17, %c0_18] : memref<1x128xf32, #tpu.memory_space<vmem>>, vector<1x128xf32>
      %23 = vector.broadcast %22 : vector<1x128xf32> to vector<2x128xf32>
      %24 = arith.addf %21, %23 : vector<2x128xf32>
      %c0_19 = arith.constant 0 : index
      %c0_20 = arith.constant 0 : index
      %25 = vector.load %arg6[%c0_19, %c0_20] : memref<2x128xf32, #tpu.memory_space<vmem>>, vector<2x128xf32>
      tpu.vector_store %arg6[%c0_19, %c0_20], %24 {strides = array<i32>} : memref<2x128xf32, #tpu.memory_space<vmem>>, vector<2x128xf32>,
    } else {
    }
    return
  }
  func.func @transform_0(%arg0: i32, %arg1: i32, %arg2: i32) -> (i32, i32, i32) {
    %c0_i32 = arith.constant 0 : i32
    return %arg0, %arg1, %arg2 : i32, i32, i32
  }
  func.func @transform_1(%arg0: i32, %arg1: i32, %arg2: i32) -> (i32, i32) {
    %c0_i32 = arith.constant 0 : i32
    %c0_i32_0 = arith.constant 0 : i32
    return %arg1, %c0_i32 : i32, i32
  }
  func.func @transform_2(%arg0: i32, %arg1: i32, %arg2: i32) -> (i32, i32) {
    %c0_i32 = arith.constant 0 : i32
    %c0_i32_0 = arith.constant 0 : i32
    %c0_i32_1 = arith.constant 0 : i32
    return %c0_i32, %c0_i32_0 : i32, i32
  }
  func.func @transform_3(%arg0: i32, %arg1: i32, %arg2: i32) -> (i32, i32) {
    %c0_i32 = arith.constant 0 : i32
    %c0_i32_0 = arith.constant 0 : i32
    return %arg0, %c0_i32 : i32, i32
  }
}

</mosaic_0001>

<llo_original>
// kernel: tpu_custom_call.1
$region0: #{tpu_custom_call.1}
  #allocation0 [shape = 'u32[]', space=smem, size = 0x4, offset = 0x4, fixed_abs, tag = 'smem constant byte address 0x4 - core index']
  #allocation1 [shape = 'u32[144,128]{1,0:T(1,128)}', space=vmem, size = 0x12000, scoped, tag = 'internal scratch']
  #allocation2 [shape = 'f32[2,4]{1,0:T(2,128)}', space=vmem, size = 0x400, scoped, tag = 'scratch operand']
  #allocation3 [shape = 'f32[2,128]{1,0:T(2,128)}', space=vmem, size = 0x400, scoped, tag = 'scratch operand']
  %s0 = inlined_call_operand.hbm [shape: f32[2,4,256], index: 0, kind: input, shape index: {}]
  %s1 = inlined_call_operand.hbm [shape: f32[4,128], index: 1, kind: input, shape index: {}]
  %s2 = inlined_call_operand.vmem [shape: f32[1,128], index: 2, kind: input, shape index: {}]
  %s3 = inlined_call_operand.hbm [shape: f32[2,128], index: 3, kind: output, shape index: {}]
  %s4 = sld [smem:[#allocation0]]
  $region46: #{tpu_custom_call.1} parent=0
    _
  %s6 = ssub.s32 1, %s4
  %s7 = scalar_select 0, %s6, %s4
  $region1: #{tpu_custom_call.1} parent=0
    #allocation4 [shape = 'u8[8192]{0}', space=vmem, size = 0x2000, scoped, tag = 'input window, operand 0, single buffered']
    #allocation5 [shape = 's32[1]{0}', space=sflag, size = 0x4, scoped, tag = 'scoped memory for tpu_custom_call.1']
    #allocation6 [shape = 's32[1]{0}', space=sflag, size = 0x4, scoped, tag = 'scoped memory for tpu_custom_call.1']
    #allocation7 [shape = 'u8[2048]{0}', space=vmem, size = 0x800, scoped, tag = 'input window, operand 1, single buffered']
    #allocation8 [shape = 's32[1]{0}', space=sflag, size = 0x4, scoped, tag = 'scoped memory for tpu_custom_call.1']
    #allocation9 [shape = 'u8[1024]{0}', space=vmem, size = 0x400, scoped, tag = 'output window, operand 0, single buffered']
    %8 = vsyncpa [#allocation5], 0
    %9 = vsyncpa [#allocation8], 0
    %10 = vsyncpa [#allocation6], 0
    // Predicated region
    $region2: #{tpu_custom_call.1} parent=1 // pred_check
      _
    $region3: #{tpu_custom_call.1} parent=1 // pred_check_branch
      %12 = sbr.rel (0) target = $region5
    $region4: #{tpu_custom_call.1} parent=1 // pred_region
      %s14 = ssub.s32 256, 256
      %15 = vsyncadd [#allocation5], %s14
      %s16 = sshll.u32 [#allocation4], 4
      %s17 = int_to_ptr.vmem [resolvable:$true] %s16
      %22 = dma.hbm_to_vmem [thread:$0]  %s0, 256, %s17, [#allocation5], 128, 128, 8
    $region5: #{tpu_custom_call.1} parent=1 // pred_fallthru
      _
    // Predicated region
    $region6: #{tpu_custom_call.1} parent=1 // pred_check
      _
    $region7: #{tpu_custom_call.1} parent=1 // pred_check_branch
      %24 = sbr.rel (0) target = $region9
    $region8: #{tpu_custom_call.1} parent=1 // pred_region
      %s26 = ssub.s32 64, 64
      %27 = vsyncadd [#allocation8], %s26
      %s29 = sshll.u32 [#allocation7], 4
      %s30 = int_to_ptr.vmem [resolvable:$true] %s29
      %32 = dma.hbm_to_vmem [thread:$0]  %s1, 64, %s30, [#allocation8]
    $region9: #{tpu_custom_call.1} parent=1 // pred_fallthru
      _
    // Predicated region
    $region10: #{tpu_custom_call.1} parent=1 // pred_check
      _
    $region11: #{tpu_custom_call.1} parent=1 // pred_check_branch
      %34 = sbr.rel (0) target = $region13
    $region12: #{tpu_custom_call.1} parent=1 // pred_region
      _
    $region13: #{tpu_custom_call.1} parent=1 // pred_fallthru
      _
    // Predicated region
    $region14: #{tpu_custom_call.1} parent=1 // pred_check
      _
    $region15: #{tpu_custom_call.1} parent=1 // pred_check_branch
      %36 = sbr.rel (0) target = $region17
    $region16: #{tpu_custom_call.1} parent=1 // pred_region
      %37 = dma.done [#allocation5], 256
    $region17: #{tpu_custom_call.1} parent=1 // pred_fallthru
      _
    // Predicated region
    $region18: #{tpu_custom_call.1} parent=1 // pred_check
      _
    $region19: #{tpu_custom_call.1} parent=1 // pred_check_branch
      %39 = sbr.rel (0) target = $region21
    $region20: #{tpu_custom_call.1} parent=1 // pred_region
      %40 = dma.done [#allocation8], 64
    $region21: #{tpu_custom_call.1} parent=1 // pred_fallthru
      _
    %p41 = scmp.eq.s32.totalorder 0, 0
    %p42 = scmp.eq.s32.totalorder 0, 0
    %p43 = pnand %p41, %p42
    %p44 = pneg %p43
    // Predicated region
    $region22: #{tpu_custom_call.1} parent=1 // pred_check
      _
    $region23: #{tpu_custom_call.1} parent=1 // pred_check_branch
      %46 = sbr.rel (%p43) target = $region25
    $region24: #{tpu_custom_call.1} parent=1 // pred_region
      %47 = vst [vmem:[#allocation3] sm:$0x3] 0.0
    $region25: #{tpu_custom_call.1} parent=1 // pred_fallthru
      _
    // Predicated region
    $region26: #{tpu_custom_call.1} parent=1 // pred_check
      %p48 = pneg %p42
    $region27: #{tpu_custom_call.1} parent=1 // pred_check_branch
      %50 = sbr.rel (%p48) target = $region29
    $region28: #{tpu_custom_call.1} parent=1 // pred_region
      %vm51 = vcmask 25600
      %52 = vst.msk [vmem:[#allocation2] sm:$0x3] %vm51, 0.0
    $region29: #{tpu_custom_call.1} parent=1 // pred_fallthru
      _
    %v53 = vld [vmem:[#allocation4] sm:$0xff]
    %v54 = vld [vmem:[#allocation4 + $0x8] sm:$0xff]
    %v55 = vld [vmem:[#allocation2] sm:$0x3]
    %v58 = vcombine.high %v53, %v53
    %v59 = vcombine.high %v54, %v54
    %vm62 = vcmask 1043456
    %v63 = vsel %vm62, %v53, 0.0
    %v64 = vsel %vm62, %v58, 0.0
    %v65 = vadd.f32 %v63, %v64
    %66 = vadd.xlane.f32.xlu0 %v65
    %v67 = vpop.xlane.xlu0 %66
    %v68 = vsel %vm62, %v54, 0.0
    %v69 = vsel %vm62, %v59, 0.0
    %v70 = vadd.f32 %v68, %v69
    %71 = vadd.xlane.f32.xlu0 %v70
    %v72 = vpop.xlane.xlu0 %71
    %v75 = vlaneseq
    %v76 = vand.u32 %v75, 127
    %v77 = vlaneseq
    %v78 = vshrl.u32 %v77, 7
    %v79 = vsub.s32 %v76, %v78
    %v80 = vrot.slane %v67, %v79
    %v81 = vlaneseq
    %v82 = vshrl.u32 %v81, 7
    %v83 = vsub.s32 %v76, %v82
    %v84 = vrot.slane %v72, %v83
    %vm85 = vcmask 1041409
    %v86 = vsel %vm85, %v84, %v80
    %v88 = vadd.f32 %v55, %v86
    %vm89 = vcmask 25600
    %90 = vst.msk [vmem:[#allocation2] sm:$0x3] %vm89, %v88
    // Predicated region
    $region30: #{tpu_custom_call.1} parent=1 // pred_check
      %p91 = pneg %p42
    $region31: #{tpu_custom_call.1} parent=1 // pred_check_branch
      %93 = sbr.rel (%p91) target = $region33
    $region32: #{tpu_custom_call.1} parent=1 // pred_region
      %v94 = vld [vmem:[#allocation3] sm:$0x3]
      %v95 = vld [vmem:[#allocation2] sm:$0x3]
      %v96 = vld [vmem:[#allocation7] sm:$0xf]
      %vm97 = vcmask 31744
      %v99 = vsel %vm97, %v95, 0
      %v102 = vsel %vm62, %v96, 0
      %104 = vmatprep.subr.mxu0 0.0
      %105 = vmatpush1.msra.mxu0 %v102
      %106 = vmatprep.subr.mxu0 0.0
      %107 = vmatpush1.msra.mxu0 0.0
      %108 = vmatprep.subr.mxu0 0.0
      %109 = vmatpush1.msra.mxu0 0.0
      %110 = vmatprep.subr.mxu0 0.0
      %111 = vmatpush1.msra.mxu0 0.0
      %112 = vmatprep.subr.mxu0 0.0
      %113 = vmatpush1.msra.mxu0 0.0
      %114 = vmatprep.subr.mxu0 0.0
      %115 = vmatpush1.msra.mxu0 0.0
      %116 = vmatprep.subr.mxu0 0.0
      %117 = vmatpush1.msra.mxu0 0.0
      %118 = vmatprep.subr.mxu0 0.0
      %119 = vmatpush1.msra.mxu0 0.0
      %120 = vmatprep.subr.mxu0 0.0
      %121 = vmatpush1.msra.mxu0 0.0
      %122 = vmatprep.subr.mxu0 0.0
      %123 = vmatpush1.msra.mxu0 0.0
      %124 = vmatprep.subr.mxu0 0.0
      %125 = vmatpush1.msra.mxu0 0.0
      %126 = vmatprep.subr.mxu0 0.0
      %127 = vmatpush1.msra.mxu0 0.0
      %128 = vmatprep.subr.mxu0 0.0
      %129 = vmatpush1.msra.mxu0 0.0
      %130 = vmatprep.subr.mxu0 0.0
      %131 = vmatpush1.msra.mxu0 0.0
      %132 = vmatprep.subr.mxu0 0.0
      %133 = vmatpush1.msra.mxu0 0.0
      %134 = vmatprep.subr.mxu0 0.0
      %135 = vmatpush1.msra.mxu0 0.0
      %136 = vmatprep.subr.mxu0 0.0
      %137 = vmatpush1.msra.mxu0 0.0
      %138 = vmatprep.subr.mxu0 0.0
      %139 = vmatpush1.msra.mxu0 0.0
      %140 = vmatprep.subr.mxu0 0.0
      %141 = vmatpush1.msra.mxu0 0.0
      %142 = vmatprep.subr.mxu0 0.0
      %143 = vmatpush1.msra.mxu0 0.0
      %144 = vmatprep.subr.mxu0 0.0
      %145 = vmatpush1.msra.mxu0 0.0
      %146 = vmatprep.subr.mxu0 0.0
      %147 = vmatpush1.msra.mxu0 0.0
      %148 = vmatprep.subr.mxu0 0.0
      %149 = vmatpush1.msra.mxu0 0.0
      %150 = vmatprep.subr.mxu0 0.0
      %151 = vmatpush1.msra.mxu0 0.0
      %152 = vmatprep.subr.mxu0 0.0
      %153 = vmatpush1.msra.mxu0 0.0
      %154 = vmatprep.subr.mxu0 0.0
      %155 = vmatpush1.msra.mxu0 0.0
      %156 = vmatprep.subr.mxu0 0.0
      %157 = vmatpush1.msra.mxu0 0.0
      %158 = vmatprep.subr.mxu0 0.0
      %159 = vmatpush1.msra.mxu0 0.0
      %160 = vmatprep.subr.mxu0 0.0
      %161 = vmatpush1.msra.mxu0 0.0
      %162 = vmatprep.subr.mxu0 0.0
      %163 = vmatpush1.msra.mxu0 0.0
      %164 = vmatprep.subr.mxu0 0.0
      %165 = vmatpush1.msra.mxu0 0.0
      %166 = vmatprep.subr.mxu0 0.0
      %167 = vmatpush1.msra.mxu0 0.0
      %168 = vmatprep.mubr.f32.mxu0 0.0
      %169 = vmatmul.mubr.f32.gmra.mrb[0].mxu0 %v99
      %v170 = vpop.f32.mrb[0].mxu0
      %v171 = vadd.f32 0.0, %v170
      %v172 = vpop.f32.mrb[0].mxu0
      %173 = vdwg.mxu0
      %v174 = vadd.f32 %v94, %v171
      %175 = vst [vmem:[#allocation3] sm:$0x3] %v174
    $region33: #{tpu_custom_call.1} parent=1 // pred_fallthru
      _
    // Predicated region
    $region34: #{tpu_custom_call.1} parent=1 // pred_check
      _
    $region35: #{tpu_custom_call.1} parent=1 // pred_check_branch
      %177 = sbr.rel (%p43) target = $region37
    $region36: #{tpu_custom_call.1} parent=1 // pred_region
      %v178 = vld [vmem:[#allocation3] sm:$0x3]
      %v179 = vld [vmem:[%s2] sm:$0x1]
      %v181 = vlaneseq
      %v182 = vshrl.u32 %v181, 7
      %v183 = vsub.s32 0, %v182
      %v184 = vrot.slane %v179, %v183
      %v186 = vadd.f32 %v178, %v184
      %187 = vst [vmem:[#allocation9] sm:$0x3] %v186
    $region37: #{tpu_custom_call.1} parent=1 // pred_fallthru
      _
    // Predicated region
    $region38: #{tpu_custom_call.1} parent=1 // pred_check
      _
    $region39: #{tpu_custom_call.1} parent=1 // pred_check_branch
      %189 = sbr.rel (0) target = $region41
    $region40: #{tpu_custom_call.1} parent=1 // pred_region
      %s191 = ssub.s32 32, 32
      %192 = vsyncadd [#allocation6], %s191
      %s194 = sshll.u32 [#allocation9], 4
      %s195 = int_to_ptr.vmem [resolvable:$true] %s194
      %197 = dma.vmem_to_hbm [thread:$0]  %s195, 32, %s3, [#allocation6]
    $region41: #{tpu_custom_call.1} parent=1 // pred_fallthru
      _
    // Predicated region
    $region42: #{tpu_custom_call.1} parent=1 // pred_check
      _
    $region43: #{tpu_custom_call.1} parent=1 // pred_check_branch
      %199 = sbr.rel (0) target = $region45
    $region44: #{tpu_custom_call.1} parent=1 // pred_region
      %200 = dma.done [#allocation6], 32
    $region45: #{tpu_custom_call.1} parent=1 // pred_fallthru
      _
    %201 = vsyncpa [#allocation5], 1
    %202 = vsyncpa [#allocation8], 1
    %203 = vsyncpa [#allocation6], 1

</llo_original>
